<compile_context>
chip_gen: v7x
topology: tpu7x:2x2x1
jax: 0.10.0
libtpu: 0.0.40
codegen_flags: <defaults>
</compile_context>

<pallas_src>
import functools

import jax
import jax.numpy as jnp
from jax.experimental import pallas as pl
from jax.experimental.pallas import tpu as pltpu

ALPHA = 1.0
GAMMA = 2  # exponent fixed at 2 -> implemented as an explicit square


def _focal_loss_kernel(logits_ref, targets_ref, out_ref, acc_ref, *, n_rows, tile_n):
    # logits_ref: (tile_n, C) any float dtype, targets_ref: (tile_n, 1) int32
    # out_ref: (1, 1) f32 (resident across the grid), acc_ref: (1, 1) f32 VMEM scratch
    i = pl.program_id(0)

    @pl.when(i == 0)
    def _init():
        acc_ref[...] = jnp.zeros_like(acc_ref)

    logits = logits_ref[...].astype(jnp.float32)  # upcast in VMEM (cheap)
    tgt = targets_ref[...]                        # (tile_n, 1) int32
    tn, c = logits.shape

    # numerically stable log-sum-exp per row
    m = jnp.max(logits, axis=-1, keepdims=True)                       # (tn, 1)
    shifted = logits - m                                              # (tn, C)
    lse = jnp.log(jnp.sum(jnp.exp(shifted), axis=-1, keepdims=True))  # (tn, 1)

    # cross-entropy without materializing log_probs: ce = lse - shifted[target]
    class_ids = jax.lax.broadcasted_iota(jnp.int32, (tn, c), dimension=1)
    onehot = (class_ids == tgt).astype(jnp.float32)                   # (tn, C)
    target_shifted = jnp.sum(onehot * shifted, axis=-1, keepdims=True)
    ce = lse - target_shifted                                         # (tn, 1)

    # focal modulation: alpha * (1 - pt)^2 * ce  (explicit square, no lax.pow)
    pt = jnp.exp(-ce)
    omp = 1.0 - pt
    focal = ALPHA * (omp * omp) * ce                                  # (tn, 1)

    # mask padded rows of the tail tile so they contribute exactly 0
    if n_rows % tile_n != 0:
        row_ids = jax.lax.broadcasted_iota(jnp.int32, (tn, 1), dimension=0)
        valid = (i * tile_n + row_ids) < n_rows
        focal = jnp.where(valid, focal, 0.0)

    acc_ref[...] += jnp.sum(focal).reshape(1, 1)

    @pl.when(i == pl.num_programs(0) - 1)
    def _finalize():
        # reduction='mean' over the true N (not tile_n * num_tiles)
        out_ref[...] = acc_ref[...] * jnp.float32(1.0 / n_rows)


def focal_loss(logits, targets, *, tile_n=256):
    """logits: (N, C) float (any dtype), targets: (N,) int -> scalar float32."""
    n, c = logits.shape
    if n <= tile_n:
        tile_n = n  # single block equal to the full row extent is always legal
    assert tile_n == n or tile_n % 8 == 0, "tile_n must be a multiple of 8"
    num_tiles = pl.cdiv(n, tile_n)

    targets2d = targets.astype(jnp.int32).reshape(n, 1)
    kernel = functools.partial(_focal_loss_kernel, n_rows=n, tile_n=tile_n)

    out = pl.pallas_call(
        kernel,
        out_shape=jax.ShapeDtypeStruct((1, 1), jnp.float32),
        grid=(num_tiles,),
        in_specs=[
            pl.BlockSpec((tile_n, c), lambda i: (i, 0)),   # logits tile
            pl.BlockSpec((tile_n, 1), lambda i: (i, 0)),   # targets tile
        ],
        out_specs=pl.BlockSpec((1, 1), lambda i: (0, 0)),  # resident scalar
        scratch_shapes=[pltpu.VMEM((1, 1), jnp.float32)],
        compiler_params=pltpu.CompilerParams(
            dimension_semantics=("arbitrary",),            # reduction axis
            vmem_limit_bytes=32 * 1024 * 1024,
        ),
    )(logits, targets2d)
    return out[0, 0]


def _reference(logits, targets):
    # plain-JAX reference of the PyTorch forward (reduction='mean')
    log_probs = jax.nn.log_softmax(logits.astype(jnp.float32), axis=-1)
    ce = -jnp.take_along_axis(log_probs, targets[:, None], axis=-1)[:, 0]
    pt = jnp.exp(-ce)
    return jnp.mean(ALPHA * (1.0 - pt) ** GAMMA * ce)


if __name__ == "__main__":
    key = jax.random.PRNGKey(0)
    k1, k2 = jax.random.split(key)
    N, C = 20, 32  # small shapes; N % tile_n != 0 exercises tail masking
    logits = jax.random.normal(k1, (N, C), dtype=jnp.float32)
    targets = jax.random.randint(k2, (N,), 0, C, dtype=jnp.int32)

    # f32 logits, tile_n=8 -> 3-step grid with a masked tail tile
    loss = focal_loss(logits, targets, tile_n=8)
    jax.block_until_ready(loss)
    ref = _reference(logits, targets)
    assert jnp.allclose(loss, ref, rtol=1e-5, atol=1e-5), (loss, ref)

    # bf16 logits passed natively (no wrapper-side f32 HBM copy); upcast in VMEM
    logits_bf16 = logits.astype(jnp.bfloat16)
    loss_bf16 = focal_loss(logits_bf16, targets, tile_n=16)
    jax.block_until_ready(loss_bf16)
    ref_bf16 = _reference(logits_bf16, targets)
    assert jnp.allclose(loss_bf16, ref_bf16, rtol=1e-5, atol=1e-5), (loss_bf16, ref_bf16)

    print("KERNEL_OK")
</pallas_src>

<mosaic_0001>
module attributes {stable_mosaic.version = 11 : i64} {
  func.func @_focal_loss_kernel(%arg0: i32, %arg1: memref<8x32xf32, #tpu.memory_space<vmem>>, %arg2: memref<8x1xi32, #tpu.memory_space<vmem>>, %arg3: memref<1x1xf32, #tpu.memory_space<vmem>>, %arg4: memref<1x1xf32, #tpu.memory_space<vmem>>) attributes {dimension_semantics = [#tpu.dimension_semantics<arbitrary>], iteration_bounds = array<i64: 3>, scalar_prefetch = 0 : i64, scratch_operands = 1 : i64, tpu.core_type = #tpu.core_type<tc>, window_params = [{transform_indices = @transform_0, window_bounds = array<i64: 8, 32>}, {transform_indices = @transform_1, window_bounds = array<i64: 8, 1>}, {pipeline_mode = #tpu.pipeline_mode<synchronous>, transform_indices = @transform_2, window_bounds = array<i64: 1, 1>}]} {
    %c0_i32 = arith.constant 0 : i32
    %0 = arith.cmpi eq, %arg0, %c0_i32 : i32
    %1 = arith.extui %0 : i1 to i32
    %c0_i32_0 = arith.constant 0 : i32
    %2 = arith.cmpi ne, %1, %c0_i32_0 : i32
    scf.if %2 {
      %cst_16 = arith.constant 0.000000e+00 : f32
      %50 = vector.broadcast %cst_16 : f32 to vector<1x1xf32>
      %c0_17 = arith.constant 0 : index
      %c0_18 = arith.constant 0 : index
      %51 = vector.load %arg4[%c0_17, %c0_18] : memref<1x1xf32, #tpu.memory_space<vmem>>, vector<1x1xf32>
      tpu.vector_store %arg4[%c0_17, %c0_18], %50 {strides = array<i32>} : memref<1x1xf32, #tpu.memory_space<vmem>>, vector<1x1xf32>,
    } else {
    }
    %c0 = arith.constant 0 : index
    %c0_1 = arith.constant 0 : index
    %3 = vector.load %arg1[%c0, %c0_1] : memref<8x32xf32, #tpu.memory_space<vmem>>, vector<8x32xf32>
    %c0_2 = arith.constant 0 : index
    %c0_3 = arith.constant 0 : index
    %4 = vector.load %arg2[%c0_2, %c0_3] : memref<8x1xi32, #tpu.memory_space<vmem>>, vector<8x1xi32>
    %cst = arith.constant dense<0xFF800000> : vector<8xf32>
    %5 = vector.multi_reduction <maximumf>, %3, %cst [1] : vector<8x32xf32> to vector<8xf32>
    %6 = vector.shape_cast %5 : vector<8xf32> to vector<8x1xf32>
    %7 = vector.broadcast %6 : vector<8x1xf32> to vector<8x32xf32>
    %8 = arith.subf %3, %7 : vector<8x32xf32>
    %9 = math.exp %8 : vector<8x32xf32>
    %cst_4 = arith.constant dense<0.000000e+00> : vector<8xf32>
    %10 = vector.multi_reduction <add>, %9, %cst_4 [1] : vector<8x32xf32> to vector<8xf32>
    %11 = vector.shape_cast %10 : vector<8xf32> to vector<8x1xf32>
    %12 = math.log %11 : vector<8x1xf32>
    %13 = tpu.iota {dimensions = array<i32: 1>} : vector<8x32xi32>
    %14 = vector.broadcast %4 : vector<8x1xi32> to vector<8x32xi32>
    %15 = arith.cmpi eq, %13, %14 : vector<8x32xi32>
    %16 = arith.extui %15 : vector<8x32xi1> to vector<8x32xi32>
    %17 = arith.sitofp %16 : vector<8x32xi32> to vector<8x32xf32>
    %18 = arith.mulf %17, %8 : vector<8x32xf32>
    %cst_5 = arith.constant dense<0.000000e+00> : vector<8xf32>
    %19 = vector.multi_reduction <add>, %18, %cst_5 [1] : vector<8x32xf32> to vector<8xf32>
    %20 = vector.shape_cast %19 : vector<8xf32> to vector<8x1xf32>
    %21 = arith.subf %12, %20 : vector<8x1xf32>
    %cst_6 = arith.constant 0.000000e+00 : f32
    %22 = vector.broadcast %cst_6 : f32 to vector<8x1xf32>
    %23 = arith.subf %22, %21 : vector<8x1xf32>
    %24 = math.exp %23 : vector<8x1xf32>
    %cst_7 = arith.constant 1.000000e+00 : f32
    %25 = vector.broadcast %cst_7 : f32 to vector<8x1xf32>
    %26 = arith.subf %25, %24 : vector<8x1xf32>
    %27 = arith.mulf %26, %26 : vector<8x1xf32>
    %cst_8 = arith.constant 1.000000e+00 : f32
    %28 = vector.broadcast %cst_8 : f32 to vector<8x1xf32>
    %29 = arith.mulf %28, %27 : vector<8x1xf32>
    %30 = arith.mulf %29, %21 : vector<8x1xf32>
    %31 = tpu.iota {dimensions = array<i32: 0>} : vector<8x1xi32>
    %c8_i32 = arith.constant 8 : i32
    %32 = arith.muli %arg0, %c8_i32 : i32
    %33 = vector.broadcast %32 : i32 to vector<8x1xi32>
    %34 = arith.addi %33, %31 : vector<8x1xi32>
    %c20_i32 = arith.constant 20 : i32
    %35 = vector.broadcast %c20_i32 : i32 to vector<8x1xi32>
    %36 = arith.cmpi slt, %34, %35 : vector<8x1xi32>
    %cst_9 = arith.constant 0.000000e+00 : f32
    %37 = vector.broadcast %cst_9 : f32 to vector<8x1xf32>
    %38 = arith.select %36, %30, %37 : vector<8x1xi1>, vector<8x1xf32>
    %c0_10 = arith.constant 0 : index
    %c0_11 = arith.constant 0 : index
    %39 = vector.load %arg4[%c0_10, %c0_11] : memref<1x1xf32, #tpu.memory_space<vmem>>, vector<1x1xf32>
    %40 = vector.shape_cast %38 : vector<8x1xf32> to vector<1x8x1xf32>
    %cst_12 = arith.constant dense<0.000000e+00> : vector<1xf32>
    %41 = vector.multi_reduction <add>, %40, %cst_12 [1, 2] : vector<1x8x1xf32> to vector<1xf32>
    %42 = vector.shape_cast %41 : vector<1xf32> to vector<1x1x1xf32>
    %43 = vector.extract %42[0, 0, 0] : f32 from vector<1x1x1xf32>
    %44 = vector.broadcast %43 : f32 to vector<1x1xf32>
    %45 = arith.addf %39, %44 : vector<1x1xf32>
    %c0_13 = arith.constant 0 : index
    %c0_14 = arith.constant 0 : index
    %46 = vector.load %arg4[%c0_13, %c0_14] : memref<1x1xf32, #tpu.memory_space<vmem>>, vector<1x1xf32>
    tpu.vector_store %arg4[%c0_13, %c0_14], %45 {strides = array<i32>} : memref<1x1xf32, #tpu.memory_space<vmem>>, vector<1x1xf32>,
    %c2_i32 = arith.constant 2 : i32
    %47 = arith.cmpi eq, %arg0, %c2_i32 : i32
    %48 = arith.extui %47 : i1 to i32
    %c0_i32_15 = arith.constant 0 : i32
    %49 = arith.cmpi ne, %48, %c0_i32_15 : i32
    scf.if %49 {
      %c0_16 = arith.constant 0 : index
      %c0_17 = arith.constant 0 : index
      %50 = vector.load %arg4[%c0_16, %c0_17] : memref<1x1xf32, #tpu.memory_space<vmem>>, vector<1x1xf32>
      %cst_18 = arith.constant 5.000000e-02 : f32
      %51 = vector.broadcast %cst_18 : f32 to vector<1x1xf32>
      %52 = arith.mulf %50, %51 : vector<1x1xf32>
      %c0_19 = arith.constant 0 : index
      %c0_20 = arith.constant 0 : index
      %53 = vector.load %arg3[%c0_19, %c0_20] : memref<1x1xf32, #tpu.memory_space<vmem>>, vector<1x1xf32>
      tpu.vector_store %arg3[%c0_19, %c0_20], %52 {strides = array<i32>} : memref<1x1xf32, #tpu.memory_space<vmem>>, vector<1x1xf32>,
    } else {
    }
    return
  }
  func.func @transform_0(%arg0: i32) -> (i32, i32) {
    %c0_i32 = arith.constant 0 : i32
    %c0_i32_0 = arith.constant 0 : i32
    return %arg0, %c0_i32 : i32, i32
  }
  func.func @transform_1(%arg0: i32) -> (i32, i32) {
    %c0_i32 = arith.constant 0 : i32
    %c0_i32_0 = arith.constant 0 : i32
    return %arg0, %c0_i32 : i32, i32
  }
  func.func @transform_2(%arg0: i32) -> (i32, i32) {
    %c0_i32 = arith.constant 0 : i32
    %c0_i32_0 = arith.constant 0 : i32
    %c0_i32_1 = arith.constant 0 : i32
    return %c0_i32, %c0_i32_0 : i32, i32
  }
}

</mosaic_0001>

<llo_original>
// kernel: tpu_custom_call.1
$region0: #{tpu_custom_call.1}
  #allocation0 [shape = 'u32[]', space=smem, size = 0x4, offset = 0x4, fixed_abs, tag = 'smem constant byte address 0x4 - core index']
  #allocation1 [shape = 'u32[144,128]{1,0:T(1,128)}', space=vmem, size = 0x12000, scoped, tag = 'internal scratch']
  #allocation2 [shape = 'f32[1,1]{1,0:T(1,128)}', space=vmem, size = 0x200, scoped, tag = 'scratch operand']
  %s0 = inlined_call_operand.vmem [shape: f32[20,32], index: 0, kind: input, shape index: {}]
  %s1 = inlined_call_operand.vmem [shape: s32[20,1], index: 1, kind: input, shape index: {}]
  %s2 = inlined_call_operand.hbm [shape: f32[1,1], index: 2, kind: output, shape index: {}]
  %s3 = sld [smem:[#allocation0]]
  $region49: #{tpu_custom_call.1} parent=0
    _
  %s5 = ssub.s32 1, %s3
  %s6 = scalar_select 0, %s5, %s3
  $region1: #{tpu_custom_call.1} parent=0
    #allocation3 [shape = 'u8[512]{0}', space=vmem, size = 0x400, scoped, tag = 'output window, operand 0, single buffered']
    #allocation4 [shape = 's32[2]{0}', space=sflag, size = 0x8, scoped, tag = 'scoped memory for tpu_custom_call.1']
    %7 = vsyncpa [#allocation4], 0
    loop: start=0, step=1, limit=5
    $region2: #{tpu_custom_call.1} parent=1 // loop_pre_header
      _
    $region3: #{tpu_custom_call.1} parent=1 // loop_header
      %s9 = sphi 0, %s13
      %p10 = scmp.ge.s32.totalorder %s9, 5
      %s19 = sphi 0, %s21
      %s22 = sphi 0, %s19
      %s23 = sphi 0, %s22
      %s39 = sphi 0, %s23
      %s45 = sphi 0, %s47
      %s48 = sphi 0, %s45
      %s49 = sphi 0, %s48
      %s65 = sphi 0, %s49
      %s69 = sphi 0, %s69
      %s71 = sphi 0, %s69
      %s72 = sphi 0, %s71
      %s86 = sphi 0, %s72
    $region4: #{tpu_custom_call.1} parent=1 // loop_header_branch
      %12 = sbr.rel (%p10) target = $region8
    $region5: #{tpu_custom_call.1} parent=1 // loop_body
      %s14 = ssub.s32 %s9, 1
      %s15 = ssub.s32 %s9, 2
      %s16 = sadd.s32 %s9, 1
      %s17 = ssub.s32 %s9, %s16
      %p18 = scmp.eq.s32.totalorder %s17, 0
      %s20 = sadd.s32 %s19, 1
      %s21 = scalar_select %p18, %s19, %s20
      %p24 = pneg %p18
      %p25 = scmp.eq.s32.totalorder %s9, 2
      %p26 = por %p24, %p25
      %p27 = scmp.ne.s32.totalorder %s19, %s22
      %p28 = scmp.eq.s32.totalorder %s9, 0
      %p29 = por %p27, %p28
      %p30 = scmp.ne.s32.totalorder %s19, %s22
      %p31 = scmp.eq.s32.totalorder %s14, 2
      %p32 = por %p30, %p31
      %p33 = scmp.ne.s32.totalorder %s22, %s23
      %p34 = scmp.eq.s32.totalorder %s14, 0
      %p35 = por %p33, %p34
      %p36 = scmp.ne.s32.totalorder %s22, %s23
      %p37 = scmp.eq.s32.totalorder %s15, 2
      %p38 = por %p36, %p37
      %p40 = scmp.ne.s32.totalorder %s23, %s39
      %p41 = scmp.eq.s32.totalorder %s15, 0
      %p42 = por %p40, %p41
      %s43 = ssub.s32 %s9, %s16
      %p44 = scmp.eq.s32.totalorder %s43, 0
      %s46 = sadd.s32 %s45, 1
      %s47 = scalar_select %p44, %s45, %s46
      %p50 = pneg %p44
      %p51 = scmp.eq.s32.totalorder %s9, 2
      %p52 = por %p50, %p51
      %p53 = scmp.ne.s32.totalorder %s45, %s48
      %p54 = scmp.eq.s32.totalorder %s9, 0
      %p55 = por %p53, %p54
      %p56 = scmp.ne.s32.totalorder %s45, %s48
      %p57 = scmp.eq.s32.totalorder %s14, 2
      %p58 = por %p56, %p57
      %p59 = scmp.ne.s32.totalorder %s48, %s49
      %p60 = scmp.eq.s32.totalorder %s14, 0
      %p61 = por %p59, %p60
      %p62 = scmp.ne.s32.totalorder %s48, %s49
      %p63 = scmp.eq.s32.totalorder %s15, 2
      %p64 = por %p62, %p63
      %p66 = scmp.ne.s32.totalorder %s49, %s65
      %p67 = scmp.eq.s32.totalorder %s15, 0
      %p68 = por %p66, %p67
      %s70 = sadd.s32 %s69, 1
      %p73 = scmp.eq.s32.totalorder %s9, 2
      %p74 = scmp.ne.s32.totalorder %s69, %s71
      %p75 = scmp.eq.s32.totalorder %s9, 0
      %p76 = por %p74, %p75
      %p77 = scmp.ne.s32.totalorder %s69, %s71
      %p78 = scmp.eq.s32.totalorder %s14, 2
      %p79 = por %p77, %p78
      %p80 = scmp.ne.s32.totalorder %s71, %s72
      %p81 = scmp.eq.s32.totalorder %s14, 0
      %p82 = por %p80, %p81
      %p83 = scmp.ne.s32.totalorder %s71, %s72
      %p84 = scmp.eq.s32.totalorder %s15, 2
      %p85 = por %p83, %p84
      %p87 = scmp.ne.s32.totalorder %s72, %s86
      %p88 = scmp.eq.s32.totalorder %s15, 0
      %p89 = por %p87, %p88
      %p90 = scmp.le.s32.totalorder 1, %s9
      %p91 = scmp.lt.s32.totalorder %s9, 4
      %p92 = pnand %p90, %p91
      %p93 = pneg %p92
      // Predicated region
      $region9: #{tpu_custom_call.1} parent=5 // pred_check
        _
      $region10: #{tpu_custom_call.1} parent=5 // pred_check_branch
        %95 = sbr.rel (%p92) target = $region12
      $region11: #{tpu_custom_call.1} parent=5 // pred_region
        %s96 = ssub.s32 %s9, 1
      $region12: #{tpu_custom_call.1} parent=5 // pred_fallthru
        _
      %p97 = scmp.lt.s32.totalorder %s9, 3
      // Predicated region
      $region13: #{tpu_custom_call.1} parent=5 // pred_check
        %p98 = pneg %p97
      $region14: #{tpu_custom_call.1} parent=5 // pred_check_branch
        %100 = sbr.rel (%p98) target = $region16
      $region15: #{tpu_custom_call.1} parent=5 // pred_region
        // Predicated region
        $region17: #{tpu_custom_call.1} parent=15 // pred_check
          %p101 = pneg %p29
        $region18: #{tpu_custom_call.1} parent=15 // pred_check_branch
          %103 = sbr.rel (%p101) target = $region20
        $region19: #{tpu_custom_call.1} parent=15 // pred_region
          %p104 = scmp.lt.s32.totalorder %s9, 2
          %s105 = scalar_select %p104, %s9, 2
          %s106 = smul.addr %s105, 8
          %s107 = scalar_lea.vmem %s0, %s106
        $region20: #{tpu_custom_call.1} parent=15 // pred_fallthru
          _
        // Predicated region
        $region21: #{tpu_custom_call.1} parent=15 // pred_check
          %p108 = pneg %p55
        $region22: #{tpu_custom_call.1} parent=15 // pred_check_branch
          %110 = sbr.rel (%p108) target = $region24
        $region23: #{tpu_custom_call.1} parent=15 // pred_region
          %p111 = scmp.lt.s32.totalorder %s9, 2
          %s112 = scalar_select %p111, %s9, 2
          %s113 = smul.addr %s112, 8
          %s114 = scalar_lea.vmem %s1, %s113
        $region24: #{tpu_custom_call.1} parent=15 // pred_fallthru
          _
      $region16: #{tpu_custom_call.1} parent=5 // pred_fallthru
        _
      %p115 = scmp.le.s32.totalorder 1, %s9
      %p116 = scmp.lt.s32.totalorder %s9, 4
      %p117 = pnand %p115, %p116
      %p118 = pneg %p117
      // Predicated region
      $region25: #{tpu_custom_call.1} parent=5 // pred_check
        _
      $region26: #{tpu_custom_call.1} parent=5 // pred_check_branch
        %120 = sbr.rel (%p117) target = $region28
      $region27: #{tpu_custom_call.1} parent=5 // pred_region
        %s121 = ssub.s32 %s9, 1
        %p122 = scmp.lt.s32.totalorder %s14, 2
        %s123 = scalar_select %p122, %s14, 2
        %s124 = smul.addr %s123, 8
        %s125 = scalar_lea.vmem %s0, %s124
        %p126 = pneg %p35
        %p127 = pneg %p32
        %p128 = scmp.lt.s32.totalorder %s14, 2
        %s129 = scalar_select %p128, %s14, 2
        %s130 = smul.addr %s129, 8
        %s131 = scalar_lea.vmem %s1, %s130
        %p132 = pneg %p61
        %p133 = pneg %p58
        %p134 = pneg %p82
        %p135 = pneg %p79
        %p136 = scmp.lt.s32.totalorder %s14, 2
        %s137 = scalar_select %p136, %s14, 2
        %s138 = smul.addr %s137, 8
        %s139 = scalar_lea.vmem %s0, %s138
        %p140 = scmp.lt.s32.totalorder %s14, 2
        %s141 = scalar_select %p140, %s14, 2
        %s142 = smul.addr %s141, 8
        %s143 = scalar_lea.vmem %s1, %s142
        %p144 = scmp.eq.s32.totalorder %s14, 0
        // Predicated region
        $region29: #{tpu_custom_call.1} parent=27 // pred_check
          %p145 = pneg %p144
        $region30: #{tpu_custom_call.1} parent=27 // pred_check_branch
          %147 = sbr.rel (%p145) target = $region32
        $region31: #{tpu_custom_call.1} parent=27 // pred_region
          %vm148 = vcmask 0
          %149 = vst.msk [vmem:[#allocation2] sm:$0x1] %vm148, 0.0
        $region32: #{tpu_custom_call.1} parent=27 // pred_fallthru
          _
        %v150 = vld [vmem:[%s139] sm:$0xff]
        %v151 = vld [vmem:[%s143] sm:$0xff]
        %vm152 = vcmask 261120
        %v153 = vsel %vm152, %v150, -inf
        %154 = vmax.xlane.f32.xlu0 %v153
        %v155 = vpop.xlane.xlu0 %154
        %v156 = vsub.f32 %v150, %v155
        %v157 = vmul.f32 %v156, 1.442695
        %v158 = vpow.pop %v157
        %v159 = vsel %vm152, %v158, 0.0
        %160 = vadd.xlane.f32.xlu0 %v159
        %v161 = vpop.xlane.xlu0 %160
        %v162 = vlog2.pop %v161
        %v163 = vmul.f32 %v162, 0.6931472
        %v164 = vlaneseq
        %v165 = vand.u32 %v164, 127
        %166 = vset.pattern.permute.xlu0 0
        %167 = vperm.xlu0 %166, %v151
        %v168 = vpop.permute.xlu0 %167
        %vm169 = vcmp.eq.s32.totalorder %v165, %v168
        %v170 = vsel %vm169, 1, 0
        %v171 = vcvt.s32.f32 %v170
        %v172 = vmul.f32 %v171, %v156
        %v173 = vsel %vm152, %v172, 0.0
        %174 = vadd.xlane.f32.xlu0 %v173
        %v175 = vpop.xlane.xlu0 %174
        %v176 = vsub.f32 %v163, %v175
        %v177 = vsub.f32 0.0, %v176
        %v178 = vmul.f32 %v177, 1.442695
        %v179 = vpow.pop %v178
        %v180 = vsub.f32 1.0, %v179
        %v181 = vmul.f32 %v180, %v180
        %v182 = vmul.f32 %v181, %v176
        %v183 = vlaneseq
        %v184 = vshrl.u32 %v183, 7
        %s185 = smul.u32 %s14, 8
        %v186 = vstv %s185
        %v187 = vadd.s32 %v186, %v184
        %vm188 = vcmp.lt.s32.totalorder %v187, 20
        %v189 = vsel %vm188, %v182, 0.0
        %v190 = vld [vmem:[#allocation2] sm:$0x1]
        %vm191 = vcmask 7168
        %v192 = vsel %vm191, %v189, 0.0
        %193 = vadd.xlane.f32.xlu0 %v192
        %v194 = vpop.xlane.xlu0 %193
        %v195 = vrot.slane %v194, 4
        %v196 = vadd.f32 %v194, %v195
        %v197 = vrot.slane %v196, 2
        %v198 = vadd.f32 %v196, %v197
        %v199 = vrot.slane %v198, 1
        %v200 = vadd.f32 %v198, %v199
        %s201 = vtos %v200
        %v202 = vstv %s201
        %v203 = vadd.f32 %v190, %v202
        %vm204 = vcmask 0
        %205 = vst.msk [vmem:[#allocation2] sm:$0x1] %vm204, %v203
        %p206 = scmp.eq.s32.totalorder %s14, 2
        // Predicated region
        $region33: #{tpu_custom_call.1} parent=27 // pred_check
          %p207 = pneg %p206
        $region34: #{tpu_custom_call.1} parent=27 // pred_check_branch
          %209 = sbr.rel (%p207) target = $region36
        $region35: #{tpu_custom_call.1} parent=27 // pred_region
          %v210 = vld [vmem:[#allocation2] sm:$0x1]
          %v211 = vmul.f32 %v210, 0.05
          %212 = vst.msk [vmem:[#allocation3] sm:$0x1] %vm204, %v211
        $region36: #{tpu_custom_call.1} parent=27 // pred_fallthru
          _
        // Predicated region
        $region37: #{tpu_custom_call.1} parent=27 // pred_check
          %p213 = pneg %p79
        $region38: #{tpu_custom_call.1} parent=27 // pred_check_branch
          %215 = sbr.rel (%p213) target = $region40
        $region39: #{tpu_custom_call.1} parent=27 // pred_region
          %s217 = ssub.s32 16, 16
          %218 = vsyncadd [#allocation4], %s217
          %s220 = sshll.u32 [#allocation3], 4
          %s221 = int_to_ptr.vmem [resolvable:$true] %s220
          %223 = dma.vmem_to_hbm [thread:$0]  %s221, 16, %s2, [#allocation4]
        $region40: #{tpu_custom_call.1} parent=27 // pred_fallthru
          _
        // Predicated region
        $region41: #{tpu_custom_call.1} parent=27 // pred_check
          %p224 = pneg %p79
        $region42: #{tpu_custom_call.1} parent=27 // pred_check_branch
          %226 = sbr.rel (%p224) target = $region44
        $region43: #{tpu_custom_call.1} parent=27 // pred_region
          %227 = dma.done [#allocation4], 16
        $region44: #{tpu_custom_call.1} parent=27 // pred_fallthru
          _
      $region28: #{tpu_custom_call.1} parent=5 // pred_fallthru
        _
      %p228 = scmp.le.s32.totalorder 2, %s9
      // Predicated region
      $region45: #{tpu_custom_call.1} parent=5 // pred_check
        %p229 = pneg %p228
      $region46: #{tpu_custom_call.1} parent=5 // pred_check_branch
        %231 = sbr.rel (%p229) target = $region48
      $region47: #{tpu_custom_call.1} parent=5 // pred_region
        %s232 = ssub.s32 %s9, 2
      $region48: #{tpu_custom_call.1} parent=5 // pred_fallthru
        _
    $region6: #{tpu_custom_call.1} parent=1 // loop_footer
      %s13 = sadd.s32 1, %s9
    $region7: #{tpu_custom_call.1} parent=1 // loop_footer_branch
      %8 = sbr.rel target = $region3
    $region8: #{tpu_custom_call.1} parent=1 // loop_exit
      _
    %233 = vsyncpa [#allocation4], 1
    %s234 = scalar_lea.sflag [#allocation4], 1
    %235 = vsyncpa %s234, 1

</llo_original>
